<compile_context>
chip_gen: v6e
topology: v6e:2x2x1
jax: 0.10.0
libtpu: 0.0.40
codegen_flags: <defaults>
</compile_context>

<pallas_src>
import jax
import jax.numpy as jnp
from jax.experimental import pallas as pl
from jax.experimental.pallas import tpu as pltpu


# ----------------------------- Pallas kernels -----------------------------

def _gcn_kernel(a_ref, x_ref, wt_ref, b_ref, o_ref):
    # (tm, Nk) @ (Nk, K) -> (tm, K), f32 accumulation on the MXU.
    h = jnp.dot(a_ref[...], x_ref[...], preferred_element_type=jnp.float32)
    # (tm, K) @ (K, Dout) + bias; the broadcast-add is free VPU filler.
    y = jnp.dot(h, wt_ref[...], preferred_element_type=jnp.float32) + b_ref[...]
    o_ref[...] = y.astype(o_ref.dtype)


def _gcn_skip_kernel(a_ref, x_ref, wt_ref, b_ref, s_ref, o_ref):
    h = jnp.dot(a_ref[...], x_ref[...], preferred_element_type=jnp.float32)
    y = jnp.dot(h, wt_ref[...], preferred_element_type=jnp.float32) + b_ref[...]
    y = y + s_ref[...].astype(jnp.float32)          # fused residual skip add
    o_ref[...] = y.astype(o_ref.dtype)


def _gcn_concat_kernel(a_ref, x1_ref, x2_ref, wt1_ref, wt2_ref, b_ref, o_ref):
    # (A @ [X1, X2]) @ W.T == (A@X1)@W1.T + (A@X2)@W2.T : concat never built.
    h1 = jnp.dot(a_ref[...], x1_ref[...], preferred_element_type=jnp.float32)
    h2 = jnp.dot(a_ref[...], x2_ref[...], preferred_element_type=jnp.float32)
    y = jnp.dot(h1, wt1_ref[...], preferred_element_type=jnp.float32)
    y = y + jnp.dot(h2, wt2_ref[...], preferred_element_type=jnp.float32)
    y = y + b_ref[...]
    o_ref[...] = y.astype(o_ref.dtype)


# ------------------------------- wrappers ----------------------------------

def _round_up(n, m):
    return ((n + m - 1) // m) * m


def _row_tiling(M, tm):
    if M >= tm:
        return _round_up(M, tm), tm
    Mp = _round_up(M, 8)           # sublane alignment; single row tile
    return Mp, Mp


def fused_gcn(A, X, W, b, skip=None, *, tm=128):
    """Y = (A @ X) @ W.T + b (+ skip).  A may be rectangular (M, Nk).

    W is (Dout, K) like nn.Linear.weight.
    TODO(synk): training-mode nn.Dropout(p=0.5) on X is treated as identity
    (eval semantics); a training kernel would draw the mask in-kernel with
    pltpu.prng_seed / pltpu.prng_random_bits.
    """
    M, Nk = A.shape
    Nk2, K = X.shape
    assert Nk == Nk2, "A columns must match X rows"
    Dout, K2 = W.shape
    assert K == K2

    Wt = jnp.transpose(W)          # (K, Dout): kernel does row-major matmuls
    b2 = b.reshape(1, Dout)

    Mp, row_tile = _row_tiling(M, tm)
    pad = Mp - M
    A_p = jnp.pad(A, ((0, pad), (0, 0))) if pad else A

    in_specs = [
        pl.BlockSpec((row_tile, Nk), lambda i: (i, 0)),   # A row tile streams
        pl.BlockSpec((Nk, K),        lambda i: (0, 0)),   # X resident in VMEM
        pl.BlockSpec((K, Dout),      lambda i: (0, 0)),   # W.T resident in VMEM
        pl.BlockSpec((1, Dout),      lambda i: (0, 0)),   # bias resident
    ]
    args = [A_p, X, Wt, b2]
    kernel = _gcn_kernel
    if skip is not None:
        skip_p = jnp.pad(skip, ((0, pad), (0, 0))) if pad else skip
        in_specs.append(pl.BlockSpec((row_tile, Dout), lambda i: (i, 0)))
        args.append(skip_p)
        kernel = _gcn_skip_kernel

    out = pl.pallas_call(
        kernel,
        out_shape=jax.ShapeDtypeStruct((Mp, Dout), X.dtype),
        grid=(Mp // row_tile,),
        in_specs=in_specs,
        out_specs=pl.BlockSpec((row_tile, Dout), lambda i: (i, 0)),
        compiler_params=pltpu.CompilerParams(
            dimension_semantics=("parallel",),   # v7x: shard row tiles on 2 TCs
        ),
    )(*args)
    return out[:M] if pad else out


def fused_gcn_concat(A, X1, X2, W, b, *, tm=128):
    """Y = (A @ concat([X1, X2], 1)) @ W.T + b without materializing the concat."""
    M, Nk = A.shape
    assert X1.shape[0] == Nk and X2.shape[0] == Nk
    K1, K2 = X1.shape[1], X2.shape[1]
    Dout, Ktot = W.shape
    assert Ktot == K1 + K2

    Wt1 = jnp.transpose(W[:, :K1])
    Wt2 = jnp.transpose(W[:, K1:])
    b2 = b.reshape(1, Dout)

    Mp, row_tile = _row_tiling(M, tm)
    pad = Mp - M
    A_p = jnp.pad(A, ((0, pad), (0, 0))) if pad else A

    out = pl.pallas_call(
        _gcn_concat_kernel,
        out_shape=jax.ShapeDtypeStruct((Mp, Dout), X1.dtype),
        grid=(Mp // row_tile,),
        in_specs=[
            pl.BlockSpec((row_tile, Nk), lambda i: (i, 0)),
            pl.BlockSpec((Nk, K1),       lambda i: (0, 0)),
            pl.BlockSpec((Nk, K2),       lambda i: (0, 0)),
            pl.BlockSpec((K1, Dout),     lambda i: (0, 0)),
            pl.BlockSpec((K2, Dout),     lambda i: (0, 0)),
            pl.BlockSpec((1, Dout),      lambda i: (0, 0)),
        ],
        out_specs=pl.BlockSpec((row_tile, Dout), lambda i: (i, 0)),
        compiler_params=pltpu.CompilerParams(
            dimension_semantics=("parallel",),
        ),
    )(A_p, X1, X2, Wt1, Wt2, b2)
    return out[:M] if pad else out


# ------------------------- plain-JAX reference GCN -------------------------

def _gcn_ref(A, X, W, b, skip=None):
    h = jnp.dot(A, X, precision=jax.lax.Precision.HIGHEST)
    y = jnp.dot(h, W.T, precision=jax.lax.Precision.HIGHEST) + b
    if skip is not None:
        y = y + skip
    return y


# ---------------- data-dependent GraphUnet pieces (plain JAX) ---------------

def graph_pool(A, X, p, k):
    # TODO(synk): top-k selection + row/col gathers are data-dependent and
    # have no static-BlockSpec equivalent; they stay in plain JAX.
    scores = jnp.dot(X, p["W"].T, precision=jax.lax.Precision.HIGHEST) + p["b"]
    scores = jax.nn.sigmoid(jnp.squeeze(scores, -1) / 100.0)
    num_nodes = A.shape[0]
    values, idx = jax.lax.top_k(scores, int(k * num_nodes))
    new_X = X[idx, :] * values[:, None]
    A = A[idx, :][:, idx]
    return A, new_X, idx


# ------------------------------ GraphUnet forward ---------------------------

def graph_unet_forward(params, A, X, ks, *, check=False):
    def gcn(A_, X_, p, skip=None):
        y = fused_gcn(A_, X_, p["W"], p["b"], skip=skip)
        if check:
            y_ref = _gcn_ref(A_, X_, p["W"], p["b"], skip=skip)
            assert jnp.allclose(y, y_ref, atol=1e-2, rtol=1e-2), "fused_gcn mismatch"
        return y

    l_n = len(ks)
    adj_ms, indices_list, down_outs = [], [], []

    X = gcn(A, X, params["start_gcn"])
    start_gcn_outs = X
    org_X = X
    for i in range(l_n):
        X = gcn(A, X, params["down_gcns"][i])
        adj_ms.append(A)
        down_outs.append(X)
        A, X, idx = graph_pool(A, X, params["pools"][i], ks[i])
        indices_list.append(idx)
    X = gcn(A, X, params["bottom_gcn"])
    for i in range(l_n):
        up_idx = l_n - i - 1
        A, idx = adj_ms[up_idx], indices_list[up_idx]
        # Unpool fused into the GCN: A @ scatter(X, idx) == A[:, idx] @ X
        # (zero rows of the scattered X contribute exact zeros), so the
        # (N_big, dim) zero-filled buffer is never materialized and the first
        # matmul shrinks to N_big x N_small x dim FLOPs.  Residual add of
        # down_outs[up_idx] is fused into the same kernel.
        A_cols = jnp.take(A, idx, axis=1)
        X = gcn(A_cols, X, params["up_gcns"][i], skip=down_outs[up_idx])
    # end_gcn on concat([X, org_X], 1), concat fused away inside the kernel.
    X_out = fused_gcn_concat(A, X, org_X,
                             params["end_gcn"]["W"], params["end_gcn"]["b"])
    if check:
        X_cat = jnp.concatenate([X, org_X], axis=1)
        y_ref = _gcn_ref(A, X_cat, params["end_gcn"]["W"], params["end_gcn"]["b"])
        assert jnp.allclose(X_out, y_ref, atol=1e-2, rtol=1e-2), \
            "fused_gcn_concat mismatch"
    return X_out, start_gcn_outs


# --------------------------------- init -------------------------------------

def init_linear(key, in_dim, out_dim):
    kw, kb = jax.random.split(key)
    s = float(in_dim) ** -0.5
    W = jax.random.uniform(kw, (out_dim, in_dim), jnp.float32, -s, s)
    b = jax.random.uniform(kb, (out_dim,), jnp.float32, -s, s)
    return {"W": W, "b": b}


def init_graph_unet(key, ks, in_dim, out_dim, dim):
    keys = jax.random.split(key, 3 + 3 * len(ks))
    params = {
        "start_gcn": init_linear(keys[0], in_dim, dim),
        "bottom_gcn": init_linear(keys[1], dim, dim),
        "end_gcn": init_linear(keys[2], 2 * dim, out_dim),
        "down_gcns": [], "up_gcns": [], "pools": [],
    }
    j = 3
    for _ in range(len(ks)):
        params["down_gcns"].append(init_linear(keys[j], dim, dim)); j += 1
        params["up_gcns"].append(init_linear(keys[j], dim, dim)); j += 1
        params["pools"].append(init_linear(keys[j], dim, 1)); j += 1
    return params


# --------------------------------- demo -------------------------------------

if __name__ == "__main__":
    ks = [0.9, 0.7, 0.6, 0.5]
    num_nodes = 96
    in_dim = 128       # feature dims are multiples of 128 -> lane-dense I/O
    dim = 128
    out_dim = 128

    key = jax.random.PRNGKey(0)
    k_adj, k_x, k_params = jax.random.split(key, 3)

    # Deterministic row-normalized symmetric adjacency with self-loops.
    adj = (jax.random.uniform(k_adj, (num_nodes, num_nodes)) < 0.1).astype(jnp.float32)
    adj = jnp.maximum(adj, adj.T)
    adj = jnp.maximum(adj, jnp.eye(num_nodes, dtype=jnp.float32))
    A = adj / jnp.sum(adj, axis=1, keepdims=True)

    X = jax.random.normal(k_x, (num_nodes, in_dim), dtype=jnp.float32)

    params = init_graph_unet(k_params, ks, in_dim, out_dim, dim)

    out, start_outs = graph_unet_forward(params, A, X, ks, check=True)
    jax.block_until_ready((out, start_outs))

    assert out.shape == (num_nodes, out_dim)
    assert start_outs.shape == (num_nodes, dim)
    assert bool(jnp.all(jnp.isfinite(out)))

    print("KERNEL_OK")
</pallas_src>

<mosaic_0001>
module attributes {stable_mosaic.version = 11 : i64} {
  func.func @_gcn_kernel(%arg0: i32, %arg1: memref<96x96xf32, #tpu.memory_space<vmem>>, %arg2: memref<96x128xf32, #tpu.memory_space<vmem>>, %arg3: memref<128x128xf32, #tpu.memory_space<vmem>>, %arg4: memref<1x128xf32, #tpu.memory_space<vmem>>, %arg5: memref<96x128xf32, #tpu.memory_space<vmem>>) attributes {dimension_semantics = [#tpu.dimension_semantics<parallel>], iteration_bounds = array<i64: 1>, scalar_prefetch = 0 : i64, scratch_operands = 0 : i64, tpu.core_type = #tpu.core_type<tc>, window_params = [{transform_indices = @transform_0, window_bounds = array<i64: 96, 96>}, {pipeline_mode = #tpu.pipeline_mode<synchronous>, transform_indices = @transform_1, window_bounds = array<i64: 96, 128>}, {pipeline_mode = #tpu.pipeline_mode<synchronous>, transform_indices = @transform_2, window_bounds = array<i64: 128, 128>}, {pipeline_mode = #tpu.pipeline_mode<synchronous>, transform_indices = @transform_3, window_bounds = array<i64: 1, 128>}, {transform_indices = @transform_4, window_bounds = array<i64: 96, 128>}]} {
    %c0 = arith.constant 0 : index
    %c0_0 = arith.constant 0 : index
    %0 = vector.load %arg1[%c0, %c0_0] : memref<96x96xf32, #tpu.memory_space<vmem>>, vector<96x96xf32>
    %c0_1 = arith.constant 0 : index
    %c0_2 = arith.constant 0 : index
    %1 = vector.load %arg2[%c0_1, %c0_2] : memref<96x128xf32, #tpu.memory_space<vmem>>, vector<96x128xf32>
    %cst = arith.constant dense<0.000000e+00> : vector<96x128xf32>
    %2 = tpu.matmul %0, %1, %cst {dimension_numbers = #tpu.dot_dimension_numbers<[1], [0], [0], [1], [0, 0, 1, 1], [], []>} : vector<96x96xf32>, vector<96x128xf32>, vector<96x128xf32> -> vector<96x128xf32>
    %c0_3 = arith.constant 0 : index
    %c0_4 = arith.constant 0 : index
    %3 = vector.load %arg3[%c0_3, %c0_4] : memref<128x128xf32, #tpu.memory_space<vmem>>, vector<128x128xf32>
    %cst_5 = arith.constant dense<0.000000e+00> : vector<96x128xf32>
    %4 = tpu.matmul %2, %3, %cst_5 {dimension_numbers = #tpu.dot_dimension_numbers<[1], [0], [0], [1], [0, 0, 1, 1], [], []>} : vector<96x128xf32>, vector<128x128xf32>, vector<96x128xf32> -> vector<96x128xf32>
    %c0_6 = arith.constant 0 : index
    %c0_7 = arith.constant 0 : index
    %5 = vector.load %arg4[%c0_6, %c0_7] : memref<1x128xf32, #tpu.memory_space<vmem>>, vector<1x128xf32>
    %6 = vector.broadcast %5 : vector<1x128xf32> to vector<96x128xf32>
    %7 = arith.addf %4, %6 : vector<96x128xf32>
    %c0_8 = arith.constant 0 : index
    %c0_9 = arith.constant 0 : index
    %8 = vector.load %arg5[%c0_8, %c0_9] : memref<96x128xf32, #tpu.memory_space<vmem>>, vector<96x128xf32>
    tpu.vector_store %arg5[%c0_8, %c0_9], %7 {strides = array<i32>} : memref<96x128xf32, #tpu.memory_space<vmem>>, vector<96x128xf32>,
    return
  }
  func.func @transform_0(%arg0: i32) -> (i32, i32) {
    %c0_i32 = arith.constant 0 : i32
    %c0_i32_0 = arith.constant 0 : i32
    return %arg0, %c0_i32 : i32, i32
  }
  func.func @transform_1(%arg0: i32) -> (i32, i32) {
    %c0_i32 = arith.constant 0 : i32
    %c0_i32_0 = arith.constant 0 : i32
    %c0_i32_1 = arith.constant 0 : i32
    return %c0_i32, %c0_i32_0 : i32, i32
  }
  func.func @transform_2(%arg0: i32) -> (i32, i32) {
    %c0_i32 = arith.constant 0 : i32
    %c0_i32_0 = arith.constant 0 : i32
    %c0_i32_1 = arith.constant 0 : i32
    return %c0_i32, %c0_i32_0 : i32, i32
  }
  func.func @transform_3(%arg0: i32) -> (i32, i32) {
    %c0_i32 = arith.constant 0 : i32
    %c0_i32_0 = arith.constant 0 : i32
    %c0_i32_1 = arith.constant 0 : i32
    return %c0_i32, %c0_i32_0 : i32, i32
  }
  func.func @transform_4(%arg0: i32) -> (i32, i32) {
    %c0_i32 = arith.constant 0 : i32
    %c0_i32_0 = arith.constant 0 : i32
    return %arg0, %c0_i32 : i32, i32
  }
}

</mosaic_0001>

<llo_original>
// kernel: tpu_custom_call.1
$region0: #{tpu_custom_call.1}
  #allocation0 [shape = 'u32[]', space=smem, size = 0x4, offset = 0x4, fixed_abs, tag = 'smem constant byte address 0x4 - core index']
  #allocation1 [shape = 'u32[144,128]{1,0:T(1,128)}', space=vmem, size = 0x12000, scoped, tag = 'internal scratch']
  %s0 = inlined_call_operand.hbm [shape: f32[96,96], index: 0, kind: input, shape index: {}]
  %s1 = inlined_call_operand.hbm [shape: f32[96,128], index: 1, kind: input, shape index: {}]
  %s2 = inlined_call_operand.hbm [shape: f32[128,128], index: 2, kind: input, shape index: {}]
  %s3 = inlined_call_operand.vmem [shape: f32[1,128], index: 3, kind: input, shape index: {}]
  %s4 = inlined_call_operand.hbm [shape: f32[96,128], index: 4, kind: output, shape index: {}]
  %s5 = sld [smem:[#allocation0]]
  $region38: #{tpu_custom_call.1} parent=0
    _
  %s7 = ssub.s32 1, %s5
  %s8 = scalar_select 0, %s7, %s5
  $region1: #{tpu_custom_call.1} parent=0
    #allocation2 [shape = 'u8[49152]{0}', space=vmem, size = 0xc000, scoped, tag = 'input window, operand 0, single buffered']
    #allocation3 [shape = 's32[1]{0}', space=sflag, size = 0x4, scoped, tag = 'scoped memory for tpu_custom_call.1']
    #allocation4 [shape = 's32[1]{0}', space=sflag, size = 0x4, scoped, tag = 'scoped memory for tpu_custom_call.1']
    #allocation5 [shape = 'u8[49152]{0}', space=vmem, size = 0xc000, scoped, tag = 'input window, operand 1, single buffered']
    #allocation6 [shape = 's32[1]{0}', space=sflag, size = 0x4, scoped, tag = 'scoped memory for tpu_custom_call.1']
    #allocation7 [shape = 'u8[65536]{0}', space=vmem, size = 0x10000, scoped, tag = 'input window, operand 2, single buffered']
    #allocation8 [shape = 'u8[49152]{0}', space=vmem, size = 0xc000, scoped, tag = 'output window, operand 0, single buffered']
    %9 = vsyncpa [#allocation3], 0
    %10 = vsyncpa [#allocation6], 0
    %11 = vsyncpa [#allocation4], 0
    // Predicated region
    $region2: #{tpu_custom_call.1} parent=1 // pred_check
      _
    $region3: #{tpu_custom_call.1} parent=1 // pred_check_branch
      %13 = sbr.rel (0) target = $region5
    $region4: #{tpu_custom_call.1} parent=1 // pred_region
      %s15 = ssub.s32 1536, 1536
      %16 = vsyncadd [#allocation3], %s15
      %s17 = sshll.u32 [#allocation2], 4
      %s18 = int_to_ptr.vmem [resolvable:$true] %s17
      %23 = dma.hbm_to_vmem [thread:$0]  %s0, 1536, %s18, [#allocation3], 128, 128, 8
    $region5: #{tpu_custom_call.1} parent=1 // pred_fallthru
      _
    // Predicated region
    $region6: #{tpu_custom_call.1} parent=1 // pred_check
      _
    $region7: #{tpu_custom_call.1} parent=1 // pred_check_branch
      %25 = sbr.rel (0) target = $region9
    $region8: #{tpu_custom_call.1} parent=1 // pred_region
      %s27 = ssub.s32 1536, 1536
      %28 = vsyncadd [#allocation6], %s27
      %s29 = sshll.u32 [#allocation5], 4
      %s30 = int_to_ptr.vmem [resolvable:$true] %s29
      %35 = dma.hbm_to_vmem [thread:$0]  %s1, 1536, %s30, [#allocation6], 128, 128, 8
    $region9: #{tpu_custom_call.1} parent=1 // pred_fallthru
      _
    // Predicated region
    $region10: #{tpu_custom_call.1} parent=1 // pred_check
      _
    $region11: #{tpu_custom_call.1} parent=1 // pred_check_branch
      %37 = sbr.rel (0) target = $region13
    $region12: #{tpu_custom_call.1} parent=1 // pred_region
      %s39 = ssub.s32 2048, 2048
      %40 = vsyncadd [#allocation6], %s39
      %s41 = sshll.u32 [#allocation7], 4
      %s42 = int_to_ptr.vmem [resolvable:$true] %s41
      %47 = dma.hbm_to_vmem [thread:$0]  %s2, 2048, %s42, [#allocation6], 128, 128, 8
    $region13: #{tpu_custom_call.1} parent=1 // pred_fallthru
      _
    // Predicated region
    $region14: #{tpu_custom_call.1} parent=1 // pred_check
      _
    $region15: #{tpu_custom_call.1} parent=1 // pred_check_branch
      %49 = sbr.rel (0) target = $region17
    $region16: #{tpu_custom_call.1} parent=1 // pred_region
      _
    $region17: #{tpu_custom_call.1} parent=1 // pred_fallthru
      _
    // Predicated region
    $region18: #{tpu_custom_call.1} parent=1 // pred_check
      _
    $region19: #{tpu_custom_call.1} parent=1 // pred_check_branch
      %51 = sbr.rel (0) target = $region21
    $region20: #{tpu_custom_call.1} parent=1 // pred_region
      %52 = dma.done [#allocation3], 1536
    $region21: #{tpu_custom_call.1} parent=1 // pred_fallthru
      _
    // Predicated region
    $region22: #{tpu_custom_call.1} parent=1 // pred_check
      _
    $region23: #{tpu_custom_call.1} parent=1 // pred_check_branch
      %54 = sbr.rel (0) target = $region25
    $region24: #{tpu_custom_call.1} parent=1 // pred_region
      %55 = dma.done [#allocation6], 1536
    $region25: #{tpu_custom_call.1} parent=1 // pred_fallthru
      _
    // Predicated region
    $region26: #{tpu_custom_call.1} parent=1 // pred_check
      _
    $region27: #{tpu_custom_call.1} parent=1 // pred_check_branch
      %57 = sbr.rel (0) target = $region29
    $region28: #{tpu_custom_call.1} parent=1 // pred_region
      %58 = dma.done [#allocation6], 2048
    $region29: #{tpu_custom_call.1} parent=1 // pred_fallthru
      _
    %v59 = vld [vmem:[#allocation2] sm:$0xff]
    %v60 = vld [vmem:[#allocation2 + $0x8] sm:$0xff]
    %v61 = vld [vmem:[#allocation2 + $0x10] sm:$0xff]
    %v62 = vld [vmem:[#allocation2 + $0x18] sm:$0xff]
    %v63 = vld [vmem:[#allocation2 + $0x20] sm:$0xff]
    %v64 = vld [vmem:[#allocation2 + $0x28] sm:$0xff]
    %v65 = vld [vmem:[#allocation2 + $0x30] sm:$0xff]
    %v66 = vld [vmem:[#allocation2 + $0x38] sm:$0xff]
    %v67 = vld [vmem:[#allocation2 + $0x40] sm:$0xff]
    %v68 = vld [vmem:[#allocation2 + $0x48] sm:$0xff]
    %v69 = vld [vmem:[#allocation2 + $0x50] sm:$0xff]
    %v70 = vld [vmem:[#allocation2 + $0x58] sm:$0xff]
    %v71 = vld [vmem:[#allocation5] sm:$0xff]
    %v72 = vld [vmem:[#allocation5 + $0x8] sm:$0xff]
    %v73 = vld [vmem:[#allocation5 + $0x10] sm:$0xff]
    %v74 = vld [vmem:[#allocation5 + $0x18] sm:$0xff]
    %v75 = vld [vmem:[#allocation5 + $0x20] sm:$0xff]
    %v76 = vld [vmem:[#allocation5 + $0x28] sm:$0xff]
    %v77 = vld [vmem:[#allocation5 + $0x30] sm:$0xff]
    %v78 = vld [vmem:[#allocation5 + $0x38] sm:$0xff]
    %v79 = vld [vmem:[#allocation5 + $0x40] sm:$0xff]
    %v80 = vld [vmem:[#allocation5 + $0x48] sm:$0xff]
    %v81 = vld [vmem:[#allocation5 + $0x50] sm:$0xff]
    %v82 = vld [vmem:[#allocation5 + $0x58] sm:$0xff]
    %vm83 = vcmask 785408
    %v85 = vsel %vm83, %v59, 0
    %v88 = vsel %vm83, %v60, 0
    %v91 = vsel %vm83, %v61, 0
    %v94 = vsel %vm83, %v62, 0
    %v97 = vsel %vm83, %v63, 0
    %v100 = vsel %vm83, %v64, 0
    %v103 = vsel %vm83, %v65, 0
    %v106 = vsel %vm83, %v66, 0
    %v109 = vsel %vm83, %v67, 0
    %v112 = vsel %vm83, %v68, 0
    %v115 = vsel %vm83, %v69, 0
    %v118 = vsel %vm83, %v70, 0
    %120 = vmatprep.subr.mxu0 0.0
    %121 = vmatpush1.msra.mxu0 0.0
    %122 = vmatprep.subr.mxu0 0.0
    %123 = vmatpush1.msra.mxu0 0.0
    %124 = vmatprep.subr.mxu0 0.0
    %125 = vmatpush1.msra.mxu0 0.0
    %126 = vmatprep.subr.mxu0 0.0
    %127 = vmatpush1.msra.mxu0 0.0
    %128 = vmatprep.subr.mxu0 0.0
    %129 = vmatpush1.msra.mxu0 %v82
    %130 = vmatprep.subr.mxu0 0.0
    %131 = vmatpush1.msra.mxu0 %v81
    %132 = vmatprep.subr.mxu0 0.0
    %133 = vmatpush1.msra.mxu0 %v80
    %134 = vmatprep.subr.mxu0 0.0
    %135 = vmatpush1.msra.mxu0 %v79
    %136 = vmatprep.subr.mxu0 0.0
    %137 = vmatpush1.msra.mxu0 %v78
    %138 = vmatprep.subr.mxu0 0.0
    %139 = vmatpush1.msra.mxu0 %v77
    %140 = vmatprep.subr.mxu0 0.0
    %141 = vmatpush1.msra.mxu0 %v76
    %142 = vmatprep.subr.mxu0 0.0
    %143 = vmatpush1.msra.mxu0 %v75
    %144 = vmatprep.subr.mxu0 0.0
    %145 = vmatpush1.msra.mxu0 %v74
    %146 = vmatprep.subr.mxu0 0.0
    %147 = vmatpush1.msra.mxu0 %v73
    %148 = vmatprep.subr.mxu0 0.0
    %149 = vmatpush1.msra.mxu0 %v72
    %150 = vmatprep.subr.mxu0 0.0
    %151 = vmatpush1.msra.mxu0 %v71
    %152 = vmatprep.subr.mxu0 0.0
    %153 = vmatpush2.msra.mxu0 0.0
    %154 = vmatprep.subr.mxu0 0.0
    %155 = vmatpush2.msra.mxu0 0.0
    %156 = vmatprep.subr.mxu0 0.0
    %157 = vmatpush2.msra.mxu0 0.0
    %158 = vmatprep.subr.mxu0 0.0
    %159 = vmatpush2.msra.mxu0 0.0
    %160 = vmatprep.subr.mxu0 0.0
    %161 = vmatpush2.msra.mxu0 0.0
    %162 = vmatprep.subr.mxu0 0.0
    %163 = vmatpush2.msra.mxu0 0.0
    %164 = vmatprep.subr.mxu0 0.0
    %165 = vmatpush2.msra.mxu0 0.0
    %166 = vmatprep.subr.mxu0 0.0
    %167 = vmatpush2.msra.mxu0 0.0
    %168 = vmatprep.subr.mxu0 0.0
    %169 = vmatpush2.msra.mxu0 0.0
    %170 = vmatprep.subr.mxu0 0.0
    %171 = vmatpush2.msra.mxu0 0.0
    %172 = vmatprep.subr.mxu0 0.0
    %173 = vmatpush2.msra.mxu0 0.0
    %174 = vmatprep.subr.mxu0 0.0
    %175 = vmatpush2.msra.mxu0 0.0
    %176 = vmatprep.subr.mxu0 0.0
    %177 = vmatpush2.msra.mxu0 0.0
    %178 = vmatprep.subr.mxu0 0.0
    %179 = vmatpush2.msra.mxu0 0.0
    %180 = vmatprep.subr.mxu0 0.0
    %181 = vmatpush2.msra.mxu0 0.0
    %182 = vmatprep.subr.mxu0 0.0
    %183 = vmatpush2.msra.mxu0 0.0
    %184 = vmatprep.mubr.f32.mxu0 0.0
    %185 = vmatmul.mubr.f32.gmra.mxu0 %v85
    %v186 = vpop.f32.mrf.mxu0
    %v187 = vadd.f32 0.0, %v186
    %v188 = vpop.f32.mrf.mxu0
    %189 = vmatprep.mubr.f32.mxu0 0.0
    %190 = vmatmul.mubr.f32.gmra.mxu0 %v88
    %v191 = vpop.f32.mrf.mxu0
    %v192 = vadd.f32 0.0, %v191
    %v193 = vpop.f32.mrf.mxu0
    %194 = vmatprep.mubr.f32.mxu0 0.0
    %195 = vmatmul.mubr.f32.gmra.mxu0 %v91
    %v196 = vpop.f32.mrf.mxu0
    %v197 = vadd.f32 0.0, %v196
    %v198 = vpop.f32.mrf.mxu0
    %199 = vmatprep.mubr.f32.mxu0 0.0
    %200 = vmatmul.mubr.f32.gmra.mxu0 %v94
    %v201 = vpop.f32.mrf.mxu0
    %v202 = vadd.f32 0.0, %v201
    %v203 = vpop.f32.mrf.mxu0
    %204 = vmatprep.mubr.f32.mxu0 0.0
    %205 = vmatmul.mubr.f32.gmra.mxu0 %v97
    %v206 = vpop.f32.mrf.mxu0
    %v207 = vadd.f32 0.0, %v206
    %v208 = vpop.f32.mrf.mxu0
    %209 = vmatprep.mubr.f32.mxu0 0.0
    %210 = vmatmul.mubr.f32.gmra.mxu0 %v100
    %v211 = vpop.f32.mrf.mxu0
    %v212 = vadd.f32 0.0, %v211
    %v213 = vpop.f32.mrf.mxu0
    %214 = vmatprep.mubr.f32.mxu0 0.0
    %215 = vmatmul.mubr.f32.gmra.mxu0 %v103
    %v216 = vpop.f32.mrf.mxu0
    %v217 = vadd.f32 0.0, %v216
    %v218 = vpop.f32.mrf.mxu0
    %219 = vmatprep.mubr.f32.mxu0 0.0
    %220 = vmatmul.mubr.f32.gmra.mxu0 %v106
    %v221 = vpop.f32.mrf.mxu0
    %v222 = vadd.f32 0.0, %v221
    %v223 = vpop.f32.mrf.mxu0
    %224 = vmatprep.mubr.f32.mxu0 0.0
    %225 = vmatmul.mubr.f32.gmra.mxu0 %v109
    %v226 = vpop.f32.mrf.mxu0
    %v227 = vadd.f32 0.0, %v226
    %v228 = vpop.f32.mrf.mxu0
    %229 = vmatprep.mubr.f32.mxu0 0.0
    %230 = vmatmul.mubr.f32.gmra.mxu0 %v112
    %v231 = vpop.f32.mrf.mxu0
    %v232 = vadd.f32 0.0, %v231
    %v233 = vpop.f32.mrf.mxu0
    %234 = vmatprep.mubr.f32.mxu0 0.0
    %235 = vmatmul.mubr.f32.gmra.mxu0 %v115
    %v236 = vpop.f32.mrf.mxu0
    %v237 = vadd.f32 0.0, %v236
    %v238 = vpop.f32.mrf.mxu0
    %239 = vmatprep.mubr.f32.mxu0 0.0
    %240 = vmatmul.mubr.f32.gmra.mxu0 %v118
    %v241 = vpop.f32.mrf.mxu0
    %v242 = vadd.f32 0.0, %v241
    %v243 = vpop.f32.mrf.mxu0
    %244 = vdwg.mxu0
    %v245 = vld [vmem:[#allocation7] sm:$0xff]
    %v246 = vld [vmem:[#allocation7 + $0x8] sm:$0xff]
    %v247 = vld [vmem:[#allocation7 + $0x10] sm:$0xff]
    %v248 = vld [vmem:[#allocation7 + $0x18] sm:$0xff]
    %v249 = vld [vmem:[#allocation7 + $0x20] sm:$0xff]
    %v250 = vld [vmem:[#allocation7 + $0x28] sm:$0xff]
    %v251 = vld [vmem:[#allocation7 + $0x30] sm:$0xff]
    %v252 = vld [vmem:[#allocation7 + $0x38] sm:$0xff]
    %v253 = vld [vmem:[#allocation7 + $0x40] sm:$0xff]
    %v254 = vld [vmem:[#allocation7 + $0x48] sm:$0xff]
    %v255 = vld [vmem:[#allocation7 + $0x50] sm:$0xff]
    %v256 = vld [vmem:[#allocation7 + $0x58] sm:$0xff]
    %v257 = vld [vmem:[#allocation7 + $0x60] sm:$0xff]
    %v258 = vld [vmem:[#allocation7 + $0x68] sm:$0xff]
    %v259 = vld [vmem:[#allocation7 + $0x70] sm:$0xff]
    %v260 = vld [vmem:[#allocation7 + $0x78] sm:$0xff]
    %v261 = vld [vmem:[%s3] sm:$0x1]
    %v263 = vlaneseq
    %v264 = vshrl.u32 %v263, 7
    %v265 = vsub.s32 0, %v264
    %v266 = vrot.slane %v261, %v265
    %268 = vmatprep.subr.mxu0 0.0
    %269 = vmatpush1.msra.mxu0 %v260
    %270 = vmatprep.subr.mxu0 0.0
    %271 = vmatpush1.msra.mxu0 %v259
    %272 = vmatprep.subr.mxu0 0.0
    %273 = vmatpush1.msra.mxu0 %v258
    %274 = vmatprep.subr.mxu0 0.0
    %275 = vmatpush1.msra.mxu0 %v257
    %276 = vmatprep.subr.mxu0 0.0
    %277 = vmatpush1.msra.mxu0 %v256
    %278 = vmatprep.subr.mxu0 0.0
    %279 = vmatpush1.msra.mxu0 %v255
    %280 = vmatprep.subr.mxu0 0.0
    %281 = vmatpush1.msra.mxu0 %v254
    %282 = vmatprep.subr.mxu0 0.0
    %283 = vmatpush1.msra.mxu0 %v253
    %284 = vmatprep.subr.mxu0 0.0
    %285 = vmatpush1.msra.mxu0 %v252
    %286 = vmatprep.subr.mxu0 0.0
    %287 = vmatpush1.msra.mxu0 %v251
    %288 = vmatprep.subr.mxu0 0.0
    %289 = vmatpush1.msra.mxu0 %v250
    %290 = vmatprep.subr.mxu0 0.0
    %291 = vmatpush1.msra.mxu0 %v249
    %292 = vmatprep.subr.mxu0 0.0
    %293 = vmatpush1.msra.mxu0 %v248
    %294 = vmatprep.subr.mxu0 0.0
    %295 = vmatpush1.msra.mxu0 %v247
    %296 = vmatprep.subr.mxu0 0.0
    %297 = vmatpush1.msra.mxu0 %v246
    %298 = vmatprep.subr.mxu0 0.0
    %299 = vmatpush1.msra.mxu0 %v245
    %300 = vmatprep.subr.mxu0 0.0
    %301 = vmatpush2.msra.mxu0 0.0
    %302 = vmatprep.subr.mxu0 0.0
    %303 = vmatpush2.msra.mxu0 0.0
    %304 = vmatprep.subr.mxu0 0.0
    %305 = vmatpush2.msra.mxu0 0.0
    %306 = vmatprep.subr.mxu0 0.0
    %307 = vmatpush2.msra.mxu0 0.0
    %308 = vmatprep.subr.mxu0 0.0
    %309 = vmatpush2.msra.mxu0 0.0
    %310 = vmatprep.subr.mxu0 0.0
    %311 = vmatpush2.msra.mxu0 0.0
    %312 = vmatprep.subr.mxu0 0.0
    %313 = vmatpush2.msra.mxu0 0.0
    %314 = vmatprep.subr.mxu0 0.0
    %315 = vmatpush2.msra.mxu0 0.0
    %316 = vmatprep.subr.mxu0 0.0
    %317 = vmatpush2.msra.mxu0 0.0
    %318 = vmatprep.subr.mxu0 0.0
    %319 = vmatpush2.msra.mxu0 0.0
    %320 = vmatprep.subr.mxu0 0.0
    %321 = vmatpush2.msra.mxu0 0.0
    %322 = vmatprep.subr.mxu0 0.0
    %323 = vmatpush2.msra.mxu0 0.0
    %324 = vmatprep.subr.mxu0 0.0
    %325 = vmatpush2.msra.mxu0 0.0
    %326 = vmatprep.subr.mxu0 0.0
    %327 = vmatpush2.msra.mxu0 0.0
    %328 = vmatprep.subr.mxu0 0.0
    %329 = vmatpush2.msra.mxu0 0.0
    %330 = vmatprep.subr.mxu0 0.0
    %331 = vmatpush2.msra.mxu0 0.0
    %332 = vmatprep.mubr.f32.mxu0 0.0
    %333 = vmatmul.mubr.f32.gmra.mxu0 %v187
    %v334 = vpop.f32.mrf.mxu0
    %v335 = vadd.f32 %v266, %v334
    %v336 = vpop.f32.mrf.mxu0
    %337 = vmatprep.mubr.f32.mxu0 0.0
    %338 = vmatmul.mubr.f32.gmra.mxu0 %v192
    %v339 = vpop.f32.mrf.mxu0
    %v340 = vadd.f32 %v266, %v339
    %v341 = vpop.f32.mrf.mxu0
    %342 = vmatprep.mubr.f32.mxu0 0.0
    %343 = vmatmul.mubr.f32.gmra.mxu0 %v197
    %v344 = vpop.f32.mrf.mxu0
    %v345 = vadd.f32 %v266, %v344
    %v346 = vpop.f32.mrf.mxu0
    %347 = vmatprep.mubr.f32.mxu0 0.0
    %348 = vmatmul.mubr.f32.gmra.mxu0 %v202
    %v349 = vpop.f32.mrf.mxu0
    %v350 = vadd.f32 %v266, %v349
    %v351 = vpop.f32.mrf.mxu0
    %352 = vmatprep.mubr.f32.mxu0 0.0
    %353 = vmatmul.mubr.f32.gmra.mxu0 %v207
    %v354 = vpop.f32.mrf.mxu0
    %v355 = vadd.f32 %v266, %v354
    %v356 = vpop.f32.mrf.mxu0
    %357 = vmatprep.mubr.f32.mxu0 0.0
    %358 = vmatmul.mubr.f32.gmra.mxu0 %v212
    %v359 = vpop.f32.mrf.mxu0
    %v360 = vadd.f32 %v266, %v359
    %v361 = vpop.f32.mrf.mxu0
    %362 = vmatprep.mubr.f32.mxu0 0.0
    %363 = vmatmul.mubr.f32.gmra.mxu0 %v217
    %v364 = vpop.f32.mrf.mxu0
    %v365 = vadd.f32 %v266, %v364
    %v366 = vpop.f32.mrf.mxu0
    %367 = vmatprep.mubr.f32.mxu0 0.0
    %368 = vmatmul.mubr.f32.gmra.mxu0 %v222
    %v369 = vpop.f32.mrf.mxu0
    %v370 = vadd.f32 %v266, %v369
    %v371 = vpop.f32.mrf.mxu0
    %372 = vmatprep.mubr.f32.mxu0 0.0
    %373 = vmatmul.mubr.f32.gmra.mxu0 %v227
    %v374 = vpop.f32.mrf.mxu0
    %v375 = vadd.f32 %v266, %v374
    %v376 = vpop.f32.mrf.mxu0
    %377 = vmatprep.mubr.f32.mxu0 0.0
    %378 = vmatmul.mubr.f32.gmra.mxu0 %v232
    %v379 = vpop.f32.mrf.mxu0
    %v380 = vadd.f32 %v266, %v379
    %v381 = vpop.f32.mrf.mxu0
    %382 = vmatprep.mubr.f32.mxu0 0.0
    %383 = vmatmul.mubr.f32.gmra.mxu0 %v237
    %v384 = vpop.f32.mrf.mxu0
    %v385 = vadd.f32 %v266, %v384
    %v386 = vpop.f32.mrf.mxu0
    %387 = vmatprep.mubr.f32.mxu0 0.0
    %388 = vmatmul.mubr.f32.gmra.mxu0 %v242
    %v389 = vpop.f32.mrf.mxu0
    %v390 = vadd.f32 %v266, %v389
    %v391 = vpop.f32.mrf.mxu0
    %392 = vdwg.mxu0
    %393 = vst [vmem:[#allocation8] sm:$0xff] %v335
    %394 = vst [vmem:[#allocation8 + $0x8] sm:$0xff] %v340
    %395 = vst [vmem:[#allocation8 + $0x10] sm:$0xff] %v345
    %396 = vst [vmem:[#allocation8 + $0x18] sm:$0xff] %v350
    %397 = vst [vmem:[#allocation8 + $0x20] sm:$0xff] %v355
    %398 = vst [vmem:[#allocation8 + $0x28] sm:$0xff] %v360
    %399 = vst [vmem:[#allocation8 + $0x30] sm:$0xff] %v365
    %400 = vst [vmem:[#allocation8 + $0x38] sm:$0xff] %v370
    %401 = vst [vmem:[#allocation8 + $0x40] sm:$0xff] %v375
    %402 = vst [vmem:[#allocation8 + $0x48] sm:$0xff] %v380
    %403 = vst [vmem:[#allocation8 + $0x50] sm:$0xff] %v385
    %404 = vst [vmem:[#allocation8 + $0x58] sm:$0xff] %v390
    // Predicated region
    $region30: #{tpu_custom_call.1} parent=1 // pred_check
      _
    $region31: #{tpu_custom_call.1} parent=1 // pred_check_branch
      %406 = sbr.rel (0) target = $region33
    $region32: #{tpu_custom_call.1} parent=1 // pred_region
      %s408 = ssub.s32 1536, 1536
      %409 = vsyncadd [#allocation4], %s408
      %s410 = sshll.u32 [#allocation8], 4
      %s411 = int_to_ptr.vmem [resolvable:$true] %s410
      %416 = dma.vmem_to_hbm [thread:$0]  %s411, 1536, %s4, [#allocation4], 128, 128, 8
    $region33: #{tpu_custom_call.1} parent=1 // pred_fallthru
      _
    // Predicated region
    $region34: #{tpu_custom_call.1} parent=1 // pred_check
      _
    $region35: #{tpu_custom_call.1} parent=1 // pred_check_branch
      %418 = sbr.rel (0) target = $region37
    $region36: #{tpu_custom_call.1} parent=1 // pred_region
      %419 = dma.done [#allocation4], 1536
    $region37: #{tpu_custom_call.1} parent=1 // pred_fallthru
      _
    %420 = vsyncpa [#allocation3], 1
    %421 = vsyncpa [#allocation6], 1
    %422 = vsyncpa [#allocation4], 1

</llo_original>
